<compile_context>
chip_gen: v5e
topology: v5e:2x2
jax: 0.10.0
libtpu: 0.0.40
codegen_flags: <defaults>
</compile_context>

<pallas_src>
import jax
import jax.numpy as jnp
from jax.experimental import pallas as pl
from jax.experimental.pallas import tpu as pltpu

_LANES = 128                            # lane-dense last dim (full vreg width)
_MAX_BLOCK_BYTES = 8 * 1024 * 1024      # per-block cap -> ~32 MiB double-buffered
_VMEM_LIMIT_BYTES = 48 * 1024 * 1024    # explicit scoped VMEM (fits v5e/v6e/v7x)


def _sublane_rows(dtype) -> int:
    """Minimum sublane-packed row tile: 8 (f32), 16 (bf16/f16), 32 (int8/fp8)."""
    itemsize = jnp.dtype(dtype).itemsize
    return 8 * (4 // itemsize)


def _auto_block_rows(rows: int, lanes: int, dtype) -> int:
    """Largest sublane-aligned row block dividing `rows` under the byte cap."""
    sub = _sublane_rows(dtype)
    itemsize = jnp.dtype(dtype).itemsize
    cap = max(sub, (_MAX_BLOCK_BYTES // (lanes * itemsize)) // sub * sub)
    block = min(rows, cap)
    block = max(sub, (block // sub) * sub)
    while rows % block != 0:            # keep the grid exact (no ragged tail)
        block -= sub
    return block


# ----------------------------------------------------------------------------
# Path 1: direct HBM -> HBM DMA copy (no VMEM round-trip, single descriptor).
# ----------------------------------------------------------------------------
def _hbm_copy_kernel(x_hbm_ref, o_hbm_ref, sem):
    cp = pltpu.make_async_copy(x_hbm_ref, o_hbm_ref, sem)
    cp.start()
    cp.wait()


def pallas_copy_hbm(x2d: jax.Array) -> jax.Array:
    """Identity copy as one HBM->HBM DMA inside a Pallas kernel."""
    return pl.pallas_call(
        _hbm_copy_kernel,
        out_shape=jax.ShapeDtypeStruct(x2d.shape, x2d.dtype),
        in_specs=[pl.BlockSpec(memory_space=pl.ANY)],
        out_specs=pl.BlockSpec(memory_space=pl.ANY),
        scratch_shapes=[pltpu.SemaphoreType.DMA(())],
    )(x2d)


# ----------------------------------------------------------------------------
# Path 2: tiled, auto-pipelined VMEM copy with generation/dtype-aware tiles.
# ----------------------------------------------------------------------------
def _identity_kernel(x_ref, o_ref):
    # The Encoder's forward performs no computation; pure VMEM pass-through.
    o_ref[...] = x_ref[...]


def pallas_identity_tiled(x2d: jax.Array, block_rows: int | None = None) -> jax.Array:
    """Identity copy through a tiled, double-buffered Pallas TPU pipeline."""
    rows, lanes = x2d.shape
    sub = _sublane_rows(x2d.dtype)
    assert lanes % _LANES == 0, "lane axis must be a multiple of 128"
    assert rows % sub == 0, f"row axis must be a multiple of {sub} for {x2d.dtype}"
    if block_rows is None:
        block_rows = _auto_block_rows(rows, lanes, x2d.dtype)
    assert block_rows % sub == 0 and rows % block_rows == 0
    grid = (rows // block_rows,)
    return pl.pallas_call(
        _identity_kernel,
        out_shape=jax.ShapeDtypeStruct(x2d.shape, x2d.dtype),
        grid_spec=pltpu.PrefetchScalarGridSpec(
            num_scalar_prefetch=0,
            grid=grid,
            in_specs=[pl.BlockSpec((block_rows, lanes), lambda i: (i, 0))],
            out_specs=pl.BlockSpec((block_rows, lanes), lambda i: (i, 0)),
        ),
        compiler_params=pltpu.CompilerParams(
            dimension_semantics=("parallel",),
            vmem_limit_bytes=_VMEM_LIMIT_BYTES,
        ),
    )(x2d)


def encoder_forward():
    """Exact semantic match of Encoder.forward(): no args, no compute, None."""
    return None


if __name__ == "__main__":
    key = jax.random.PRNGKey(0)
    k0, k1 = jax.random.split(key)

    # Faithful forward: returns None (module body is `pass`).
    assert encoder_forward() is None

    # Small deterministic example tensor (2x4x16x16 = 2048 elems = 16 x 128);
    # the Encoder itself takes no inputs — this only exercises the kernels.
    x = jax.random.normal(k0, (2, 4, 16, 16), dtype=jnp.float32)
    x2d = x.reshape(16, _LANES)          # lane-dense slab

    # Path 1: HBM -> HBM DMA identity.
    y_dma = pallas_copy_hbm(x2d)
    jax.block_until_ready(y_dma)
    assert jnp.array_equal(y_dma, x2d)

    # Path 2a: tiled VMEM copy, auto block (whole slab fits one block here).
    y_tiled = pallas_identity_tiled(x2d)
    jax.block_until_ready(y_tiled)
    assert jnp.array_equal(y_tiled, x2d)

    # Path 2b: multi-step grid (4 steps) so BlockSpec double-buffering overlaps
    # DMA-in / copy / DMA-out; still tiny (128 KiB) for a quick check.
    x_big = jax.random.normal(k1, (256, _LANES), dtype=jnp.float32)
    y_big = pallas_identity_tiled(x_big, block_rows=64)
    jax.block_until_ready(y_big)
    assert jnp.array_equal(y_big, x_big)

    # Path 2c: dtype-aware sublane tiling for a packed dtype (bf16 -> 16-row min).
    x_bf16 = x_big.astype(jnp.bfloat16)
    y_bf16 = pallas_identity_tiled(x_bf16, block_rows=64)
    jax.block_until_ready(y_bf16)
    assert jnp.array_equal(y_bf16, x_bf16)

    print("KERNEL_OK")
</pallas_src>

<mosaic_0001>
module attributes {stable_mosaic.version = 11 : i64} {
  func.func @_hbm_copy_kernel(%arg0: memref<16x128xf32, #tpu.memory_space<any>>, %arg1: memref<16x128xf32, #tpu.memory_space<any>>, %arg2: memref<!tpu.dma_semaphore, #tpu.memory_space<semaphore_mem>>) attributes {dimension_semantics = [], scalar_prefetch = 0 : i64, scratch_operands = 1 : i64, tpu.core_type = #tpu.core_type<tc>} {
    tpu.enqueue_dma source(%arg0 : memref<16x128xf32, #tpu.memory_space<any>>) target(%arg1 : memref<16x128xf32, #tpu.memory_space<any>>) target_semaphore(%arg2 : memref<!tpu.dma_semaphore, #tpu.memory_space<semaphore_mem>>)
    tpu.wait_dma2 semaphore(%arg2 : memref<!tpu.dma_semaphore, #tpu.memory_space<semaphore_mem>>) src(%arg0 : memref<16x128xf32, #tpu.memory_space<any>>) dst(%arg1 : memref<16x128xf32, #tpu.memory_space<any>>)
    return
  }
}

</mosaic_0001>

<llo_original>
// kernel: tpu_custom_call.1
$region0: #{tpu_custom_call.1}
  #allocation0 [shape = 'u32[]', space=smem, size = 0x4, offset = 0x4, fixed_abs, tag = 'smem constant byte address 0x4 - core index']
  #allocation1 [shape = 'u32[72,128]{1,0:T(1,128)}', space=vmem, size = 0x9000, scoped, tag = 'internal scratch']
  #allocation2 [shape = 's32[1]{0}', space=sflag, size = 0x4, scoped, tag = 'scratch operand']
  #allocation3 [shape = 's32[]', space=sflag, size = 0x4, offset = 0, fixed_abs, tag = 'sflag constant byte address 0x0 - dummy sync flag']
  #allocation4 [shape = 'u32[0]{0}', space=smem, size = 0, offset = 0, fixed_abs, tag = 'smem constant byte address 0x0 - null']
  %s0 = inlined_call_operand.hbm [shape: f32[16,128], index: 0, kind: input, shape index: {}]
  %s1 = inlined_call_operand.hbm [shape: f32[16,128], index: 1, kind: output, shape index: {}]
  %s2 = sld [smem:[#allocation0]]
  $region2: #{tpu_custom_call.1} parent=0
    _
  %s4 = ssub.s32 1, %s2
  %s5 = scalar_select 0, %s4, %s2
  %s7 = sshll.u32 1, 14
  %s8 = sxor.u32 4294967295, %s7
  %s10 = sshll.u32 %s0, 4
  %s11 = int_to_ptr.hbm [resolvable:$true] %s10
  %s12 = sshll.u32 %s1, 4
  %s13 = int_to_ptr.hbm [resolvable:$true] %s12
  %16 = dma.general %s11, 256, %s13, [#allocation2], [#allocation3], [#allocation4], 0, 0
  %s17 = smul.u32 16, 1
  %s18 = sshll.u32 %s17, 4
  %19 = dma.done [#allocation2], %s18
  %20 = vsyncmov [#allocation2]
  %s21 = vpop.sfrf %20
  %p22 = scmp.eq.s32.totalorder %s21, 0
  %p23 = pneg %p22
  %25 = shalt.err (%p23)

</llo_original>
